<compile_context>
chip_gen: v5e
topology: v5e:2x2
jax: 0.10.0
libtpu: 0.0.40
codegen_flags: <defaults>
</compile_context>

<pallas_src>
import functools
import math

import jax
import jax.numpy as jnp
from jax.experimental import pallas as pl
from jax.experimental.pallas import tpu as pltpu


def _label_smoothing_kernel(x_ref, tgt_ref, out_ref, *,
                            confidence, smooth_val, n_rows, needs_mask):
    step = pl.program_id(0)

    x = x_ref[...].astype(jnp.float32)          # (tile_n, M) log-probs
    tgt = tgt_ref[...]                          # (tile_n, 1) int32 class ids
    tn, M = x.shape

    # scatter_(1, target, confidence) via a one-hot compare (pure VPU select).
    col_ids = jax.lax.broadcasted_iota(jnp.int32, (tn, M), 1)
    true_dist = jnp.where(col_ids == tgt,
                          jnp.float32(confidence),
                          jnp.float32(smooth_val))

    contrib = true_dist * x                     # the t*x term (negated at store)
    if needs_mask:                              # tail tile: zero invalid rows
        row_ids = jax.lax.broadcasted_iota(jnp.int32, (tn, M), 0) + step * tn
        contrib = jnp.where(row_ids < n_rows, contrib, jnp.float32(0.0))

    # Fold tile_n rows into 8 sublane rows with VPU adds only; the tiny final
    # cross-lane/sublane reduce over all per-tile partials happens in XLA.
    partial = jnp.sum(contrib.reshape(tn // 8, 8, M), axis=0)
    out_ref[...] = -partial


def label_smoothing_loss(x, target, *, size, smoothing=0.0, tile_n=None):
    """x: (N, size) float log-probabilities; target: (N,) integer labels."""
    N, M = x.shape
    assert M == size, "x.shape[1] must equal `size`"
    assert size > 1 or smoothing == 0.0, "smoothing > 0 requires size > 1"

    confidence = 1.0 - smoothing
    smooth_val = smoothing / (size - 1) if size > 1 else 0.0

    itemsize = jnp.dtype(x.dtype).itemsize
    if tile_n is None:
        # Target ~3 MiB x-blocks (hides per-grid-step overhead), multiple of 8
        # sublanes, and never much larger than the (padded) number of rows.
        tile_n = max(8, min(2048, ((3 << 20) // max(1, M * itemsize)) // 8 * 8))
    tile_n = max(8, (tile_n // 8) * 8)
    tile_n = min(tile_n, max(8, ((N + 7) // 8) * 8))

    num_tiles = pl.cdiv(N, tile_n)
    needs_mask = (N % tile_n) != 0

    target2d = target.reshape(N, 1).astype(jnp.int32)

    kernel = functools.partial(
        _label_smoothing_kernel,
        confidence=confidence, smooth_val=smooth_val,
        n_rows=N, needs_mask=needs_mask)

    # VMEM budget: double-buffered x / target blocks + per-tile output block.
    est_vmem = 2 * (tile_n * M * itemsize            # x block (native dtype)
                    + tile_n * 128 * 4               # (tile_n,1) i32, lane-padded
                    + 8 * max(M, 128) * 4)           # (8, M) f32 partial
    vmem_limit = int(min(max(est_vmem + (8 << 20), 32 << 20), 48 << 20))

    partials = pl.pallas_call(
        kernel,
        out_shape=jax.ShapeDtypeStruct((num_tiles * 8, M), jnp.float32),
        grid=(num_tiles,),
        in_specs=[
            pl.BlockSpec((tile_n, M), lambda i: (i, 0)),   # x row tile
            pl.BlockSpec((tile_n, 1), lambda i: (i, 0)),   # target row tile
        ],
        out_specs=pl.BlockSpec((8, M), lambda i: (i, 0)),  # per-tile partials
        compiler_params=pltpu.CompilerParams(
            dimension_semantics=("parallel",),             # no carried state
            vmem_limit_bytes=vmem_limit),
    )(x, target2d)

    # Hoisted sum_{n,m} t*log(t): only two distinct t values exist per row.
    def _xlogx(v):
        return v * math.log(v) if v > 0.0 else 0.0

    t_log_t_const = N * (_xlogx(confidence) + (M - 1) * _xlogx(smooth_val))

    # TODO(synk): for vocab-scale M, add a second (class) grid axis instead of
    # blocking the full row, and re-budget tile sizes for v7x's 64 MiB VMEM.
    return jnp.sum(partials) + jnp.float32(t_log_t_const)


def _reference(x, target, *, size, smoothing):
    confidence = 1.0 - smoothing
    smooth_val = smoothing / (size - 1)
    one_hot = jax.nn.one_hot(target, size, dtype=jnp.float32)
    true_dist = one_hot * confidence + (1.0 - one_hot) * smooth_val
    t_log_t = jnp.where(true_dist > 0,
                        true_dist * jnp.log(jnp.maximum(true_dist, 1e-38)), 0.0)
    return jnp.sum(t_log_t - true_dist * x.astype(jnp.float32))


if __name__ == "__main__":
    N, SIZE = 24, 32
    SMOOTHING = 0.1

    key = jax.random.PRNGKey(0)
    k1, k2 = jax.random.split(key)
    logits = jax.random.normal(k1, (N, SIZE), dtype=jnp.float32)
    x = jax.nn.log_softmax(logits, axis=-1)          # (N, M) log-probabilities
    target = jax.random.randint(k2, (N,), 0, SIZE, dtype=jnp.int32)

    # tile_n=16 with N=24 forces a masked tail tile, exercising the general
    # (N % tile_n != 0) path at demo scale; the default tile_n is much larger.
    loss = label_smoothing_loss(x, target, size=SIZE, smoothing=SMOOTHING,
                                tile_n=16)
    loss = jax.block_until_ready(loss)

    ref = _reference(x, target, size=SIZE, smoothing=SMOOTHING)
    assert jnp.allclose(loss, ref, rtol=1e-5, atol=1e-4), (loss, ref)

    print("KERNEL_OK")
</pallas_src>

<mosaic_0001>
module attributes {stable_mosaic.version = 11 : i64} {
  func.func @_label_smoothing_kernel(%arg0: i32, %arg1: memref<16x32xf32, #tpu.memory_space<vmem>>, %arg2: memref<16x1xi32, #tpu.memory_space<vmem>>, %arg3: memref<8x32xf32, #tpu.memory_space<vmem>>) attributes {dimension_semantics = [#tpu.dimension_semantics<parallel>], iteration_bounds = array<i64: 2>, scalar_prefetch = 0 : i64, scratch_operands = 0 : i64, tpu.core_type = #tpu.core_type<tc>, window_params = [{transform_indices = @transform_0, window_bounds = array<i64: 16, 32>}, {transform_indices = @transform_1, window_bounds = array<i64: 16, 1>}, {transform_indices = @transform_2, window_bounds = array<i64: 8, 32>}]} {
    %c0 = arith.constant 0 : index
    %c0_0 = arith.constant 0 : index
    %0 = vector.load %arg1[%c0, %c0_0] : memref<16x32xf32, #tpu.memory_space<vmem>>, vector<16x32xf32>
    %c0_1 = arith.constant 0 : index
    %c0_2 = arith.constant 0 : index
    %1 = vector.load %arg2[%c0_1, %c0_2] : memref<16x1xi32, #tpu.memory_space<vmem>>, vector<16x1xi32>
    %2 = tpu.iota {dimensions = array<i32: 1>} : vector<16x32xi32>
    %3 = vector.broadcast %1 : vector<16x1xi32> to vector<16x32xi32>
    %4 = arith.cmpi eq, %2, %3 : vector<16x32xi32>
    %cst = arith.constant 0.899999976 : f32
    %cst_3 = arith.constant 0.0032258064 : f32
    %5 = vector.broadcast %cst : f32 to vector<16x32xf32>
    %6 = vector.broadcast %cst_3 : f32 to vector<16x32xf32>
    %7 = arith.select %4, %5, %6 : vector<16x32xi1>, vector<16x32xf32>
    %8 = arith.mulf %7, %0 : vector<16x32xf32>
    %9 = tpu.iota {dimensions = array<i32: 0>} : vector<16x32xi32>
    %c16_i32 = arith.constant 16 : i32
    %10 = arith.muli %arg0, %c16_i32 : i32
    %11 = vector.broadcast %10 : i32 to vector<16x32xi32>
    %12 = arith.addi %9, %11 : vector<16x32xi32>
    %c24_i32 = arith.constant 24 : i32
    %13 = vector.broadcast %c24_i32 : i32 to vector<16x32xi32>
    %14 = arith.cmpi slt, %12, %13 : vector<16x32xi32>
    %cst_4 = arith.constant 0.000000e+00 : f32
    %15 = vector.broadcast %cst_4 : f32 to vector<16x32xf32>
    %16 = arith.select %14, %8, %15 : vector<16x32xi1>, vector<16x32xf32>
    %17 = vector.shape_cast %16 : vector<16x32xf32> to vector<2x8x32xf32>
    %cst_5 = arith.constant dense<0.000000e+00> : vector<8x32xf32>
    %18 = vector.multi_reduction <add>, %17, %cst_5 [0] : vector<2x8x32xf32> to vector<8x32xf32>
    %cst_6 = arith.constant 0.000000e+00 : f32
    %19 = vector.broadcast %cst_6 : f32 to vector<8x32xf32>
    %20 = arith.subf %19, %18 : vector<8x32xf32>
    %c0_7 = arith.constant 0 : index
    %c0_8 = arith.constant 0 : index
    %21 = vector.load %arg3[%c0_7, %c0_8] : memref<8x32xf32, #tpu.memory_space<vmem>>, vector<8x32xf32>
    tpu.vector_store %arg3[%c0_7, %c0_8], %20 {strides = array<i32>} : memref<8x32xf32, #tpu.memory_space<vmem>>, vector<8x32xf32>,
    return
  }
  func.func @transform_0(%arg0: i32) -> (i32, i32) {
    %c0_i32 = arith.constant 0 : i32
    %c0_i32_0 = arith.constant 0 : i32
    return %arg0, %c0_i32 : i32, i32
  }
  func.func @transform_1(%arg0: i32) -> (i32, i32) {
    %c0_i32 = arith.constant 0 : i32
    %c0_i32_0 = arith.constant 0 : i32
    return %arg0, %c0_i32 : i32, i32
  }
  func.func @transform_2(%arg0: i32) -> (i32, i32) {
    %c0_i32 = arith.constant 0 : i32
    %c0_i32_0 = arith.constant 0 : i32
    return %arg0, %c0_i32 : i32, i32
  }
}

</mosaic_0001>

<llo_original>
// kernel: tpu_custom_call.1
$region0: #{tpu_custom_call.1}
  #allocation0 [shape = 'u32[]', space=smem, size = 0x4, offset = 0x4, fixed_abs, tag = 'smem constant byte address 0x4 - core index']
  #allocation1 [shape = 'u32[72,128]{1,0:T(1,128)}', space=vmem, size = 0x9000, scoped, tag = 'internal scratch']
  %s0 = inlined_call_operand.vmem [shape: f32[24,32], index: 0, kind: input, shape index: {}]
  %s1 = inlined_call_operand.vmem [shape: s32[24,1], index: 1, kind: input, shape index: {}]
  %s2 = inlined_call_operand.hbm [shape: f32[16,32], index: 2, kind: output, shape index: {}]
  %s3 = sld [smem:[#allocation0]]
  $region41: #{tpu_custom_call.1} parent=0
    _
  %s5 = ssub.s32 1, %s3
  %s6 = scalar_select 0, %s5, %s3
  $region1: #{tpu_custom_call.1} parent=0
    #allocation2 [shape = 'u8[8192]{0}', space=vmem, size = 0x2000, scoped, tag = 'output window, operand 0']
    #allocation3 [shape = 's32[2]{0}', space=sflag, size = 0x8, scoped, tag = 'scoped memory for tpu_custom_call.1']
    %7 = vsyncpa [#allocation3], 0
    %s8 = scalar_lea.sflag [#allocation3], 1
    %9 = vsyncpa %s8, 0
    loop: start=0, step=1, limit=4
    $region2: #{tpu_custom_call.1} parent=1 // loop_pre_header
      _
    $region3: #{tpu_custom_call.1} parent=1 // loop_header
      %s11 = sphi 0, %s15
      %p12 = scmp.ge.s32.totalorder %s11, 4
      %s21 = sphi 0, %s23
      %s24 = sphi 0, %s21
      %s25 = sphi 0, %s24
      %s41 = sphi 0, %s25
      %s47 = sphi 0, %s49
      %s50 = sphi 0, %s47
      %s51 = sphi 0, %s50
      %s67 = sphi 0, %s51
      %s73 = sphi 0, %s75
      %s76 = sphi 0, %s73
      %s77 = sphi 0, %s76
      %s93 = sphi 0, %s77
    $region4: #{tpu_custom_call.1} parent=1 // loop_header_branch
      %14 = sbr.rel (%p12) target = $region8
    $region5: #{tpu_custom_call.1} parent=1 // loop_body
      %s16 = ssub.s32 %s11, 1
      %s17 = ssub.s32 %s11, 2
      %s18 = sadd.s32 %s11, 1
      %s19 = ssub.s32 %s11, %s18
      %p20 = scmp.eq.s32.totalorder %s19, 0
      %s22 = sadd.s32 %s21, 1
      %s23 = scalar_select %p20, %s21, %s22
      %p26 = pneg %p20
      %p27 = scmp.eq.s32.totalorder %s11, 1
      %p28 = por %p26, %p27
      %p29 = scmp.ne.s32.totalorder %s21, %s24
      %p30 = scmp.eq.s32.totalorder %s11, 0
      %p31 = por %p29, %p30
      %p32 = scmp.ne.s32.totalorder %s21, %s24
      %p33 = scmp.eq.s32.totalorder %s16, 1
      %p34 = por %p32, %p33
      %p35 = scmp.ne.s32.totalorder %s24, %s25
      %p36 = scmp.eq.s32.totalorder %s16, 0
      %p37 = por %p35, %p36
      %p38 = scmp.ne.s32.totalorder %s24, %s25
      %p39 = scmp.eq.s32.totalorder %s17, 1
      %p40 = por %p38, %p39
      %p42 = scmp.ne.s32.totalorder %s25, %s41
      %p43 = scmp.eq.s32.totalorder %s17, 0
      %p44 = por %p42, %p43
      %s45 = ssub.s32 %s11, %s18
      %p46 = scmp.eq.s32.totalorder %s45, 0
      %s48 = sadd.s32 %s47, 1
      %s49 = scalar_select %p46, %s47, %s48
      %p52 = pneg %p46
      %p53 = scmp.eq.s32.totalorder %s11, 1
      %p54 = por %p52, %p53
      %p55 = scmp.ne.s32.totalorder %s47, %s50
      %p56 = scmp.eq.s32.totalorder %s11, 0
      %p57 = por %p55, %p56
      %p58 = scmp.ne.s32.totalorder %s47, %s50
      %p59 = scmp.eq.s32.totalorder %s16, 1
      %p60 = por %p58, %p59
      %p61 = scmp.ne.s32.totalorder %s50, %s51
      %p62 = scmp.eq.s32.totalorder %s16, 0
      %p63 = por %p61, %p62
      %p64 = scmp.ne.s32.totalorder %s50, %s51
      %p65 = scmp.eq.s32.totalorder %s17, 1
      %p66 = por %p64, %p65
      %p68 = scmp.ne.s32.totalorder %s51, %s67
      %p69 = scmp.eq.s32.totalorder %s17, 0
      %p70 = por %p68, %p69
      %s71 = ssub.s32 %s11, %s18
      %p72 = scmp.eq.s32.totalorder %s71, 0
      %s74 = sadd.s32 %s73, 1
      %s75 = scalar_select %p72, %s73, %s74
      %p78 = pneg %p72
      %p79 = scmp.eq.s32.totalorder %s11, 1
      %p80 = por %p78, %p79
      %p81 = scmp.ne.s32.totalorder %s73, %s76
      %p82 = scmp.eq.s32.totalorder %s11, 0
      %p83 = por %p81, %p82
      %p84 = scmp.ne.s32.totalorder %s73, %s76
      %p85 = scmp.eq.s32.totalorder %s16, 1
      %p86 = por %p84, %p85
      %p87 = scmp.ne.s32.totalorder %s76, %s77
      %p88 = scmp.eq.s32.totalorder %s16, 0
      %p89 = por %p87, %p88
      %p90 = scmp.ne.s32.totalorder %s76, %s77
      %p91 = scmp.eq.s32.totalorder %s17, 1
      %p92 = por %p90, %p91
      %p94 = scmp.ne.s32.totalorder %s77, %s93
      %p95 = scmp.eq.s32.totalorder %s17, 0
      %p96 = por %p94, %p95
      %p97 = scmp.le.s32.totalorder 1, %s11
      %p98 = scmp.lt.s32.totalorder %s11, 3
      %p99 = pnand %p97, %p98
      %p100 = pneg %p99
      // Predicated region
      $region9: #{tpu_custom_call.1} parent=5 // pred_check
        _
      $region10: #{tpu_custom_call.1} parent=5 // pred_check_branch
        %102 = sbr.rel (%p99) target = $region12
      $region11: #{tpu_custom_call.1} parent=5 // pred_region
        %s103 = ssub.s32 %s11, 1
      $region12: #{tpu_custom_call.1} parent=5 // pred_fallthru
        _
      %p104 = scmp.lt.s32.totalorder %s11, 2
      // Predicated region
      $region13: #{tpu_custom_call.1} parent=5 // pred_check
        %p105 = pneg %p104
      $region14: #{tpu_custom_call.1} parent=5 // pred_check_branch
        %107 = sbr.rel (%p105) target = $region16
      $region15: #{tpu_custom_call.1} parent=5 // pred_region
        // Predicated region
        $region17: #{tpu_custom_call.1} parent=15 // pred_check
          %p108 = pneg %p31
        $region18: #{tpu_custom_call.1} parent=15 // pred_check_branch
          %110 = sbr.rel (%p108) target = $region20
        $region19: #{tpu_custom_call.1} parent=15 // pred_region
          %s111 = smul.u32 2, %s11
          %s112 = ssub.s32 3, %s111
          %p113 = scmp.lt.s32.totalorder %s112, 2
          %s114 = scalar_select %p113, %s112, 2
          %s115 = smul.u32 8, %s114
          %p116 = scmp.lt.s32.totalorder %s111, 2
          %s117 = scalar_select %p116, %s111, 2
          %s118 = smul.addr %s117, 8
          %s119 = scalar_lea.vmem %s0, %s118
          %s120 = smul.u32 2, %s11
          %s121 = ssub.s32 3, %s120
          %p122 = scmp.lt.s32.totalorder %s121, 2
          %s123 = scalar_select %p122, %s121, 2
          %s124 = smul.u32 8, %s123
        $region20: #{tpu_custom_call.1} parent=15 // pred_fallthru
          _
        // Predicated region
        $region21: #{tpu_custom_call.1} parent=15 // pred_check
          %p125 = pneg %p57
        $region22: #{tpu_custom_call.1} parent=15 // pred_check_branch
          %127 = sbr.rel (%p125) target = $region24
        $region23: #{tpu_custom_call.1} parent=15 // pred_region
          %s128 = smul.u32 2, %s11
          %s129 = ssub.s32 3, %s128
          %p130 = scmp.lt.s32.totalorder %s129, 2
          %s131 = scalar_select %p130, %s129, 2
          %s132 = smul.u32 8, %s131
          %p133 = scmp.lt.s32.totalorder %s128, 2
          %s134 = scalar_select %p133, %s128, 2
          %s135 = smul.addr %s134, 8
          %s136 = scalar_lea.vmem %s1, %s135
          %s137 = smul.u32 2, %s11
          %s138 = ssub.s32 3, %s137
          %p139 = scmp.lt.s32.totalorder %s138, 2
          %s140 = scalar_select %p139, %s138, 2
          %s141 = smul.u32 8, %s140
        $region24: #{tpu_custom_call.1} parent=15 // pred_fallthru
          _
      $region16: #{tpu_custom_call.1} parent=5 // pred_fallthru
        _
      %p142 = scmp.le.s32.totalorder 1, %s11
      %p143 = scmp.lt.s32.totalorder %s11, 3
      %p144 = pnand %p142, %p143
      %p145 = pneg %p144
      // Predicated region
      $region25: #{tpu_custom_call.1} parent=5 // pred_check
        _
      $region26: #{tpu_custom_call.1} parent=5 // pred_check_branch
        %147 = sbr.rel (%p144) target = $region28
      $region27: #{tpu_custom_call.1} parent=5 // pred_region
        %s148 = ssub.s32 %s11, 1
        %s149 = smul.u32 2, %s16
        %s150 = ssub.s32 3, %s149
        %p151 = scmp.lt.s32.totalorder %s150, 2
        %s152 = scalar_select %p151, %s150, 2
        %s153 = smul.u32 8, %s152
        %p154 = scmp.lt.s32.totalorder %s149, 2
        %s155 = scalar_select %p154, %s149, 2
        %s156 = smul.addr %s155, 8
        %s157 = scalar_lea.vmem %s0, %s156
        %p158 = pneg %p37
        %p159 = pneg %p34
        %s160 = smul.u32 2, %s16
        %s161 = ssub.s32 3, %s160
        %p162 = scmp.lt.s32.totalorder %s161, 2
        %s163 = scalar_select %p162, %s161, 2
        %s164 = smul.u32 8, %s163
        %p165 = scmp.lt.s32.totalorder %s160, 2
        %s166 = scalar_select %p165, %s160, 2
        %s167 = smul.addr %s166, 8
        %s168 = scalar_lea.vmem %s1, %s167
        %p169 = pneg %p63
        %p170 = pneg %p60
        %p171 = pneg %p89
        %p172 = pneg %p86
        %s173 = sand.u32 %s76, 1
        %s174 = scalar_lea.sflag [#allocation3], %s173
        %s175 = sand.u32 %s76, 1
        %s176 = smul.addr %s175, 8
        %s177 = scalar_lea.vmem [#allocation2], %s176
        %s178 = smul.u32 2, %s16
        %s179 = ssub.s32 3, %s178
        %p180 = scmp.lt.s32.totalorder %s179, 2
        %s181 = scalar_select %p180, %s179, 2
        %s182 = smul.u32 8, %s181
        %p183 = scmp.lt.s32.totalorder %s178, 2
        %s184 = scalar_select %p183, %s178, 2
        %s185 = smul.addr %s184, 8
        %s186 = scalar_lea.vmem %s0, %s185
        %s187 = smul.u32 2, %s16
        %s188 = ssub.s32 3, %s187
        %p189 = scmp.lt.s32.totalorder %s188, 2
        %s190 = scalar_select %p189, %s188, 2
        %s191 = smul.u32 8, %s190
        %s192 = smul.u32 2, %s16
        %s193 = ssub.s32 3, %s192
        %p194 = scmp.lt.s32.totalorder %s193, 2
        %s195 = scalar_select %p194, %s193, 2
        %s196 = smul.u32 8, %s195
        %p197 = scmp.lt.s32.totalorder %s192, 2
        %s198 = scalar_select %p197, %s192, 2
        %s199 = smul.addr %s198, 8
        %s200 = scalar_lea.vmem %s1, %s199
        %s201 = smul.u32 2, %s16
        %s202 = ssub.s32 3, %s201
        %p203 = scmp.lt.s32.totalorder %s202, 2
        %s204 = scalar_select %p203, %s202, 2
        %s205 = smul.u32 8, %s204
        %v206 = vld [vmem:[%s186] sm:$0xff]
        %v207 = vld [vmem:[%s186 + $0x8] sm:$0xff]
        %v208 = vld [vmem:[%s200] sm:$0xff]
        %v209 = vld [vmem:[%s200 + $0x8] sm:$0xff]
        %v210 = vlaneseq
        %v211 = vand.u32 %v210, 127
        %212 = vset.pattern.permute.xlu0 0
        %213 = vperm.xlu0 %212, %v208
        %v214 = vpop.permute.xlu0 %213
        %215 = vset.pattern.permute.xlu0 0
        %216 = vperm.xlu0 %215, %v209
        %v217 = vpop.permute.xlu0 %216
        %vm218 = vcmp.eq.s32.totalorder %v211, %v214
        %vm219 = vcmp.eq.s32.totalorder %v211, %v217
        %v220 = vsel %vm218, 0.9, 0.0032258064
        %v221 = vsel %vm219, 0.9, 0.0032258064
        %v222 = vmul.f32 %v220, %v206
        %v223 = vmul.f32 %v221, %v207
        %v224 = vlaneseq
        %v225 = vshrl.u32 %v224, 7
        %v226 = vadd.s32 %v225, 8
        %s227 = smul.u32 %s16, 16
        %v228 = vstv %s227
        %v229 = vadd.s32 %v225, %v228
        %v230 = vadd.s32 %v226, %v228
        %vm231 = vcmp.lt.s32.totalorder %v229, 24
        %vm232 = vcmp.lt.s32.totalorder %v230, 24
        %v233 = vsel %vm231, %v222, 0.0
        %v234 = vsel %vm232, %v223, 0.0
        %vm235 = vcmask 261120
        %v236 = vsel %vm235, %v233, 0.0
        %v237 = vsel %vm235, %v234, 0.0
        %v238 = vadd.f32 %v236, %v237
        %v239 = vsub.f32 0.0, %v238
        %240 = vst.msk [vmem:[%s177] sm:$0xff] %vm235, %v239
        %s241 = sand.u32 %s76, 1
        %s242 = scalar_lea.sflag [#allocation3], %s241
        %s243 = sand.u32 %s76, 1
        %s244 = smul.addr %s243, 8
        %s245 = scalar_lea.vmem [#allocation2], %s244
        // Predicated region
        $region29: #{tpu_custom_call.1} parent=27 // pred_check
          %p246 = pneg %p86
        $region30: #{tpu_custom_call.1} parent=27 // pred_check_branch
          %248 = sbr.rel (%p246) target = $region32
        $region31: #{tpu_custom_call.1} parent=27 // pred_region
          %250 = vsyncadd %s242, 0
          %s251 = smul.addr %s16, 8
          %s252 = scalar_lea.hbm %s2, %s251
          %s254 = sshll.u32 %s245, 4
          %s255 = int_to_ptr.vmem [resolvable:$true] %s254
          %s256 = sshll.u32 %s252, 4
          %s257 = int_to_ptr.hbm [resolvable:$true] %s256
          %259 = dma.vmem_to_hbm [thread:$0]  %s255, 128, %s257, %s242
        $region32: #{tpu_custom_call.1} parent=27 // pred_fallthru
          _
      $region28: #{tpu_custom_call.1} parent=5 // pred_fallthru
        _
      %p260 = scmp.le.s32.totalorder 2, %s11
      // Predicated region
      $region33: #{tpu_custom_call.1} parent=5 // pred_check
        %p261 = pneg %p260
      $region34: #{tpu_custom_call.1} parent=5 // pred_check_branch
        %263 = sbr.rel (%p261) target = $region36
      $region35: #{tpu_custom_call.1} parent=5 // pred_region
        %s264 = ssub.s32 %s11, 2
        // Predicated region
        $region37: #{tpu_custom_call.1} parent=35 // pred_check
          %p265 = pneg %p92
        $region38: #{tpu_custom_call.1} parent=35 // pred_check_branch
          %267 = sbr.rel (%p265) target = $region40
        $region39: #{tpu_custom_call.1} parent=35 // pred_region
          %s268 = sand.u32 %s77, 1
          %s269 = scalar_lea.sflag [#allocation3], %s268
          %s270 = sand.u32 %s77, 1
          %s271 = smul.addr %s270, 8
          %s272 = scalar_lea.vmem [#allocation2], %s271
          %274 = dma.done %s269, 128
        $region40: #{tpu_custom_call.1} parent=35 // pred_fallthru
          _
      $region36: #{tpu_custom_call.1} parent=5 // pred_fallthru
        _
    $region6: #{tpu_custom_call.1} parent=1 // loop_footer
      %s15 = sadd.s32 1, %s11
    $region7: #{tpu_custom_call.1} parent=1 // loop_footer_branch
      %10 = sbr.rel target = $region3
    $region8: #{tpu_custom_call.1} parent=1 // loop_exit
      _
    %275 = vsyncpa [#allocation3], 1
    %s276 = scalar_lea.sflag [#allocation3], 1
    %277 = vsyncpa %s276, 1

</llo_original>
